<compile_context>
chip_gen: v5e
topology: v5e:2x2
jax: 0.10.0
libtpu: 0.0.40
codegen_flags: <defaults>
</compile_context>

<pallas_src>
import jax
import jax.numpy as jnp
from jax.experimental import pallas as pl
from jax.experimental.pallas import tpu as pltpu


def _line_kernel(wb_ref, out_ref):
    # Scalar-unit add entirely in SMEM: out = w + b.
    out_ref[0] = wb_ref[0] + wb_ref[1]


@jax.jit
def compute_sum(wb):
    """Pallas kernel: (2,) packed params in SMEM -> (1,) sum in SMEM.

    Called only when parameters change (init / optimizer step), not per
    forward call.
    """
    return pl.pallas_call(
        _line_kernel,
        out_shape=jax.ShapeDtypeStruct((1,), jnp.float32),
        in_specs=[pl.BlockSpec(memory_space=pltpu.SMEM)],
        out_specs=pl.BlockSpec(memory_space=pltpu.SMEM),
        cost_estimate=pl.CostEstimate(
            flops=1, transcendentals=0, bytes_accessed=12
        ),
    )(wb)


def pack_params(w, b):
    """One-time parameter packing + precompute of w+b (init / update time).

    Returns (wb_packed, cached_sum).  The cached sum is what forward returns.
    """
    wb = jnp.concatenate([w, b]).astype(jnp.float32)  # shape (2,)
    return wb, compute_sum(wb)


def line_forward(x, cached_sum):
    """Mimics Line.forward: returns w + b with shape (1,), regardless of x.

    x is accepted only for signature parity with the PyTorch module; it is
    never read and never crosses a jit / custom-call boundary.
    """
    del x
    return cached_sum


if __name__ == "__main__":
    key = jax.random.PRNGKey(0)
    kw, kb, kx = jax.random.split(key, 3)

    # Deterministic synthetic parameters (shapes match nn.Parameter(torch.randn(1))).
    w = jax.random.normal(kw, (1,), dtype=jnp.float32)
    b = jax.random.normal(kb, (1,), dtype=jnp.float32)

    # Pack + run the Pallas kernel once at "init" time.
    wb, cached_sum = pack_params(w, b)
    jax.block_until_ready(cached_sum)

    # Example input (unused by forward, but provided for signature parity).
    x = jax.random.normal(kx, (2, 4, 16, 16), dtype=jnp.float32)

    y = line_forward(x, cached_sum)
    jax.block_until_ready(y)

    # Correctness check against the trivial reference.
    expected = w + b
    assert y.shape == (1,)
    assert jnp.allclose(y, expected, atol=1e-6), (y, expected)

    print("KERNEL_OK")
</pallas_src>

<mosaic_0001>
module attributes {stable_mosaic.version = 11 : i64} {
  func.func @_line_kernel(%arg0: memref<2xf32, #tpu.memory_space<smem>>, %arg1: memref<1xf32, #tpu.memory_space<smem>>) attributes {dimension_semantics = [], scalar_prefetch = 0 : i64, scratch_operands = 0 : i64, tpu.core_type = #tpu.core_type<tc>} {
    %c0 = arith.constant 0 : index
    %0 = memref.load %arg0[%c0] : memref<2xf32, #tpu.memory_space<smem>>
    %c1 = arith.constant 1 : index
    %1 = memref.load %arg0[%c1] : memref<2xf32, #tpu.memory_space<smem>>
    %2 = arith.addf %0, %1 : f32
    %c0_0 = arith.constant 0 : index
    %3 = memref.load %arg1[%c0_0] : memref<1xf32, #tpu.memory_space<smem>>
    memref.store %2, %arg1[%c0_0] : memref<1xf32, #tpu.memory_space<smem>>
    return
  }
}

</mosaic_0001>

<llo_original>
// kernel: compute_sum.1
$region0: #{compute_sum.1}
  #allocation0 [shape = 'u32[]', space=smem, size = 0x4, offset = 0x4, fixed_abs, tag = 'smem constant byte address 0x4 - core index']
  #allocation1 [shape = 'u32[72,128]{1,0:T(1,128)}', space=vmem, size = 0x9000, scoped, tag = 'internal scratch']
  %s0 = inlined_call_operand.hbm [shape: f32[2], index: 0, kind: input, shape index: {}]
  %s1 = inlined_call_operand.hbm [shape: f32[1], index: 1, kind: output, shape index: {}]
  %s2 = sld [smem:[#allocation0]]
  $region18: #{compute_sum.1} parent=0
    _
  %s4 = ssub.s32 1, %s2
  %s5 = scalar_select 0, %s4, %s2
  $region1: #{compute_sum.1} parent=0
    #allocation2 [shape = 'u8[512]{0}', space=smem, size = 0x200, scoped, tag = 'input window, operand 0, single buffered']
    #allocation3 [shape = 's32[1]{0}', space=sflag, size = 0x4, scoped, tag = 'scoped memory for compute_sum.1']
    #allocation4 [shape = 's32[1]{0}', space=sflag, size = 0x4, scoped, tag = 'scoped memory for compute_sum.1']
    #allocation5 [shape = 'u8[512]{0}', space=smem, size = 0x200, scoped, tag = 'output window, operand 0, single buffered']
    %6 = vsyncpa [#allocation3], 0
    %7 = vsyncpa [#allocation4], 0
    // Predicated region
    $region2: #{compute_sum.1} parent=1 // pred_check
      _
    $region3: #{compute_sum.1} parent=1 // pred_check_branch
      %9 = sbr.rel (0) target = $region5
    $region4: #{compute_sum.1} parent=1 // pred_region
      %11 = vsyncadd [#allocation3], 0
      %s13 = sshll.u32 %s0, 4
      %s14 = int_to_ptr.hbm [resolvable:$true] %s13
      %16 = dma.hbm_to_smem %s14, 16, [#allocation2], [#allocation3]
    $region5: #{compute_sum.1} parent=1 // pred_fallthru
      _
    // Predicated region
    $region6: #{compute_sum.1} parent=1 // pred_check
      _
    $region7: #{compute_sum.1} parent=1 // pred_check_branch
      %18 = sbr.rel (0) target = $region9
    $region8: #{compute_sum.1} parent=1 // pred_region
      %20 = dma.done [#allocation3], 16
    $region9: #{compute_sum.1} parent=1 // pred_fallthru
      _
    %21 = sfence
    %s22 = sld [smem:[#allocation2]]
    %s23 = sld [smem:[#allocation2 + $0x1]]
    %s24 = sadd.f32 %s22, %s23
    %s25 = scalar_lea.smem [#allocation5], 0
    %26 = sst [smem:[%s25]] %s24
    // Predicated region
    $region10: #{compute_sum.1} parent=1 // pred_check
      _
    $region11: #{compute_sum.1} parent=1 // pred_check_branch
      %28 = sbr.rel (0) target = $region13
    $region12: #{compute_sum.1} parent=1 // pred_region
      %30 = vsyncadd [#allocation4], 0
      %s32 = sshll.u32 %s1, 4
      %s33 = int_to_ptr.hbm [resolvable:$true] %s32
      %35 = dma.smem_to_hbm [#allocation5], 16, %s33, [#allocation4]
    $region13: #{compute_sum.1} parent=1 // pred_fallthru
      _
    // Predicated region
    $region14: #{compute_sum.1} parent=1 // pred_check
      _
    $region15: #{compute_sum.1} parent=1 // pred_check_branch
      %37 = sbr.rel (0) target = $region17
    $region16: #{compute_sum.1} parent=1 // pred_region
      %39 = dma.done [#allocation4], 16
    $region17: #{compute_sum.1} parent=1 // pred_fallthru
      _
    %40 = sfence
    %41 = vsyncpa [#allocation3], 1
    %42 = vsyncpa [#allocation4], 1

</llo_original>
